<compile_context>
chip_gen: v6e
topology: v6e:2x2x1
jax: 0.10.0
libtpu: 0.0.40
codegen_flags: <defaults>
</compile_context>

<pallas_src>
import functools

import jax
import jax.numpy as jnp
from jax.experimental import pallas as pl
from jax.experimental.pallas import tpu as pltpu

BN_EPS = 1e-5
LEAKY_SLOPE = 0.2


def _disc_classifier_kernel(img_ref, sent_ref, w1i_ref, w1s_ref, gamma_ref,
                            beta_ref, w2_ref, b2_ref, out_ref,
                            y_sc, s1_sc, *, batch, hw, mxu_dtype):
    # img_ref:   (1, enc, hw)  one batch item, channels on sublanes, spatial on lanes
    # sent_ref:  (1, emb, 1)   one batch item's sentence embedding (column)
    # w1i_ref:   (enc, enc)    1x1-conv weight, image-channel columns (native out,in)
    # w1s_ref:   (enc, emb)    1x1-conv weight, sentence-channel columns
    # gamma/beta:(enc, 1)      BatchNorm2d affine params
    # w2_ref:    (enc, hw)     final KxK conv weight (K == feat_size)
    # b2_ref:    (1,) SMEM     final conv bias
    # out_ref:   (B, 1)        output (written on last grid step only)
    # y_sc:      (B, enc, hw)  persistent VMEM scratch holding post-conv activations
    # s1_sc:     (enc, 1)      per-channel running sum for the BN mean
    f32 = jnp.float32
    b = pl.program_id(0)
    nb = pl.num_programs(0)

    @pl.when(b == 0)
    def _init():
        s1_sc[...] = jnp.zeros_like(s1_sc)

    # --- phase 1: 1x1 conv (bias=False) + fused sentence spatial broadcast ---------
    img = img_ref[0].astype(mxu_dtype)                              # (enc_in, hw)
    w1i = w1i_ref[...].astype(mxu_dtype)                            # (enc_out, enc_in)
    y = jnp.dot(w1i, img, preferred_element_type=f32)               # (enc, hw)   MXU
    sent = sent_ref[0].astype(mxu_dtype)                            # (emb, 1)
    w1s = w1s_ref[...].astype(mxu_dtype)                            # (enc, emb)
    s_col = jnp.dot(w1s, sent, preferred_element_type=f32)          # (enc, 1)    MXU
    y = y + s_col                                                   # lane broadcast (VPU)

    y_sc[b] = y                                                     # persist for phase 2
    s1_sc[...] += jnp.sum(y, axis=1, keepdims=True)                 # per-channel partial sum

    # --- phase 2 (last step): centered BN + LeakyReLU(0.2) + KxK conv --------------
    @pl.when(b == nb - 1)
    def _finish():
        inv_n = 1.0 / (batch * hw)
        mean = s1_sc[...] * inv_n                                   # (enc, 1)
        yc = y_sc[...] - mean[None]                                 # (B, enc, hw) centered
        ssq = jnp.sum(yc * yc, axis=2, keepdims=True)               # (B, enc, 1)  lane reduce
        var = jnp.sum(ssq, axis=0) * inv_n                          # (enc, 1)  two-pass variance
        scale = gamma_ref[...] * jax.lax.rsqrt(var + BN_EPS)        # (enc, 1)   EUP rsqrt
        ynorm = yc * scale[None] + beta_ref[...][None]              # single FMA pass
        act = jnp.maximum(ynorm, LEAKY_SLOPE * ynorm)               # LeakyReLU(0.2), one VALU op
        t = act * w2_ref[...][None]                                 # broadcast w2 (no tile)
        r = jnp.sum(t, axis=2)                                      # (B, enc)  lane reduce
        out_ref[...] = jnp.sum(r, axis=1, keepdims=True) + b2_ref[0]  # (B, 1)


def init_params(key, enc_dim, emb_dim, feat_size):
    k1, k2, k3 = jax.random.split(key, 3)
    inp_dim = enc_dim + emb_dim
    # PyTorch conv1 weight (enc_out, inp_dim, 1, 1) used in its native (out, in) layout;
    # split into image-channel and sentence-channel column blocks.
    w1 = jax.random.normal(k1, (enc_dim, inp_dim), jnp.float32) * 0.05
    w1_img = w1[:, :enc_dim]                                  # (enc, enc)
    w1_sent = w1[:, enc_dim:]                                 # (enc, emb)
    gamma = jnp.ones((enc_dim, 1), jnp.float32)               # BN affine init
    beta = jnp.zeros((enc_dim, 1), jnp.float32)
    # PyTorch conv2 weight (1, enc, K, K) -> (enc, K*K): a free reshape, no transpose.
    w2 = (jax.random.normal(k2, (1, enc_dim, feat_size, feat_size), jnp.float32)
          * 0.05).reshape(enc_dim, feat_size * feat_size)
    b2 = jax.random.normal(k3, (1,), jnp.float32) * 0.05      # scalar bias -> SMEM
    return dict(w1_img=w1_img, w1_sent=w1_sent, gamma=gamma, beta=beta, w2=w2, b2=b2)


def disc_classifier_forward(sent_code, img_code, params, *, mxu_dtype=jnp.bfloat16):
    B, enc, H, W = img_code.shape
    emb = sent_code.shape[1]
    hw = H * W
    assert params["w2"].shape[1] == hw, "conv2 kernel must equal the feature-map size"

    # Free reshapes only — no NCHW->NHWC HBM transpose, no wrapper-side dtype cast.
    img3 = img_code.reshape(B, enc, hw)          # (B, enc, hw): channels on sublanes
    sent3 = sent_code[:, :, None]                # (B, emb, 1)

    kernel = functools.partial(_disc_classifier_kernel, batch=B, hw=hw,
                               mxu_dtype=mxu_dtype)
    smem = pl.BlockSpec(memory_space=pltpu.MemorySpace.SMEM)

    def const(shape):  # full-array block, resident across the whole grid
        return pl.BlockSpec(shape, lambda b, _s=shape: tuple(0 for _ in _s))

    itemsize = img_code.dtype.itemsize
    param_bytes = sum(int(params[k].size) * 4
                      for k in ("w1_img", "w1_sent", "gamma", "beta", "w2", "b2"))
    bytes_accessed = int(img3.size) * itemsize + int(sent3.size) * itemsize \
        + param_bytes + B * 4
    flops = 2 * B * hw * enc * enc + 2 * B * enc * emb + 12 * B * enc * hw

    out = pl.pallas_call(
        kernel,
        grid=(B,),
        out_shape=jax.ShapeDtypeStruct((B, 1), jnp.float32),
        in_specs=[
            pl.BlockSpec((1, enc, hw), lambda b: (b, 0, 0)),   # img: pipelined per batch
            pl.BlockSpec((1, emb, 1), lambda b: (b, 0, 0)),    # sent column per batch
            const((enc, enc)),                                 # w1 image-channel block
            const((enc, emb)),                                 # w1 sentence-channel block
            const((enc, 1)),                                   # gamma
            const((enc, 1)),                                   # beta
            const((enc, hw)),                                  # w2 (KxK conv weight)
            smem,                                              # b2 scalar bias
        ],
        out_specs=pl.BlockSpec((B, 1), lambda b: (0, 0)),
        scratch_shapes=[
            pltpu.VMEM((B, enc, hw), jnp.float32),             # persistent y
            pltpu.VMEM((enc, 1), jnp.float32),                 # BN per-channel sum
        ],
        compiler_params=pltpu.CompilerParams(dimension_semantics=("arbitrary",)),
        cost_estimate=pl.CostEstimate(flops=flops, transcendentals=enc,
                                      bytes_accessed=bytes_accessed),
    )(img3, sent3, params["w1_img"], params["w1_sent"],
      params["gamma"], params["beta"], params["w2"], params["b2"])
    # PyTorch: output.view(-1, chn) with chn == 1  ->  (B, 1)
    return out


def _reference(sent_code, img_code, params, mxu_dtype=jnp.bfloat16):
    """Pure-JAX reference with identical math (bf16 MXU operands, f32 accumulate)."""
    B, enc, H, W = img_code.shape
    hw = H * W
    img = img_code.reshape(B, enc, hw).astype(mxu_dtype)
    y = jnp.einsum("oc,bcp->bop", params["w1_img"].astype(mxu_dtype), img,
                   preferred_element_type=jnp.float32)
    s = jnp.einsum("oe,be->bo", params["w1_sent"].astype(mxu_dtype),
                   sent_code.astype(mxu_dtype), preferred_element_type=jnp.float32)
    y = y + s[:, :, None]
    mean = y.mean(axis=(0, 2), keepdims=True)
    var = ((y - mean) ** 2).mean(axis=(0, 2), keepdims=True)
    yn = ((y - mean) * jax.lax.rsqrt(var + BN_EPS) * params["gamma"][None]
          + params["beta"][None])
    act = jnp.where(yn > 0, yn, LEAKY_SLOPE * yn)
    out = jnp.sum(act * params["w2"][None], axis=(1, 2))[:, None] + params["b2"][0]
    return out


if __name__ == "__main__":
    B, enc_dim, emb_dim, feat_size = 2, 32, 16, 8

    key = jax.random.PRNGKey(0)
    kp, ks, ki = jax.random.split(key, 3)
    params = init_params(kp, enc_dim, emb_dim, feat_size)
    sent_code = jax.random.normal(ks, (B, emb_dim), jnp.float32)
    img_code = jax.random.normal(ki, (B, enc_dim, feat_size, feat_size), jnp.float32)

    out = disc_classifier_forward(sent_code, img_code, params)
    out = jax.block_until_ready(out)

    ref = _reference(sent_code, img_code, params)
    assert out.shape == (B, 1), out.shape
    assert jnp.allclose(out, ref, atol=2e-2, rtol=2e-2), (out, ref)
    print("KERNEL_OK")
</pallas_src>

<mosaic_0001>
module attributes {stable_mosaic.version = 11 : i64} {
  func.func @_disc_classifier_kernel(%arg0: i32, %arg1: memref<1x32x64xf32, #tpu.memory_space<vmem>>, %arg2: memref<1x16x1xf32, #tpu.memory_space<vmem>>, %arg3: memref<32x32xf32, #tpu.memory_space<vmem>>, %arg4: memref<32x16xf32, #tpu.memory_space<vmem>>, %arg5: memref<32x1xf32, #tpu.memory_space<vmem>>, %arg6: memref<32x1xf32, #tpu.memory_space<vmem>>, %arg7: memref<32x64xf32, #tpu.memory_space<vmem>>, %arg8: memref<1xf32, #tpu.memory_space<smem>>, %arg9: memref<2x1xf32, #tpu.memory_space<vmem>>, %arg10: memref<2x32x64xf32, #tpu.memory_space<vmem>>, %arg11: memref<32x1xf32, #tpu.memory_space<vmem>>) attributes {dimension_semantics = [#tpu.dimension_semantics<arbitrary>], iteration_bounds = array<i64: 2>, scalar_prefetch = 0 : i64, scratch_operands = 2 : i64, tpu.core_type = #tpu.core_type<tc>, window_params = [{transform_indices = @transform_0, window_bounds = array<i64: 1, 32, 64>}, {transform_indices = @transform_1, window_bounds = array<i64: 1, 16, 1>}, {pipeline_mode = #tpu.pipeline_mode<synchronous>, transform_indices = @transform_2, window_bounds = array<i64: 32, 32>}, {pipeline_mode = #tpu.pipeline_mode<synchronous>, transform_indices = @transform_3, window_bounds = array<i64: 32, 16>}, {pipeline_mode = #tpu.pipeline_mode<synchronous>, transform_indices = @transform_4, window_bounds = array<i64: 32, 1>}, {pipeline_mode = #tpu.pipeline_mode<synchronous>, transform_indices = @transform_5, window_bounds = array<i64: 32, 1>}, {pipeline_mode = #tpu.pipeline_mode<synchronous>, transform_indices = @transform_6, window_bounds = array<i64: 32, 64>}, {transform_indices = @transform_7, window_bounds = array<i64: 1>}, {pipeline_mode = #tpu.pipeline_mode<synchronous>, transform_indices = @transform_8, window_bounds = array<i64: 2, 1>}]} {
    %c0_i32 = arith.constant 0 : i32
    %0 = arith.cmpi eq, %arg0, %c0_i32 : i32
    %1 = arith.extui %0 : i1 to i32
    %c0_i32_0 = arith.constant 0 : i32
    %2 = arith.cmpi ne, %1, %c0_i32_0 : i32
    scf.if %2 {
      %cst_19 = arith.constant 0.000000e+00 : f32
      %29 = vector.broadcast %cst_19 : f32 to vector<32x1xf32>
      %c0_20 = arith.constant 0 : index
      %c0_21 = arith.constant 0 : index
      %30 = vector.load %arg11[%c0_20, %c0_21] : memref<32x1xf32, #tpu.memory_space<vmem>>, vector<32x1xf32>
      tpu.vector_store %arg11[%c0_20, %c0_21], %29 {strides = array<i32>} : memref<32x1xf32, #tpu.memory_space<vmem>>, vector<32x1xf32>,
    } else {
    }
    %c0 = arith.constant 0 : index
    %c0_1 = arith.constant 0 : index
    %c0_2 = arith.constant 0 : index
    %3 = vector.load %arg1[%c0, %c0_1, %c0_2] : memref<1x32x64xf32, #tpu.memory_space<vmem>>, vector<1x32x64xf32>
    %4 = vector.shape_cast %3 : vector<1x32x64xf32> to vector<32x64xf32>
    %5 = arith.truncf %4 : vector<32x64xf32> to vector<32x64xbf16>
    %c0_3 = arith.constant 0 : index
    %c0_4 = arith.constant 0 : index
    %6 = vector.load %arg3[%c0_3, %c0_4] : memref<32x32xf32, #tpu.memory_space<vmem>>, vector<32x32xf32>
    %7 = arith.truncf %6 : vector<32x32xf32> to vector<32x32xbf16>
    %cst = arith.constant dense<0.000000e+00> : vector<32x64xf32>
    %8 = tpu.matmul %7, %5, %cst {dimension_numbers = #tpu.dot_dimension_numbers<[1], [0], [0], [1], [0, 0, 1, 1], [], []>} : vector<32x32xbf16>, vector<32x64xbf16>, vector<32x64xf32> -> vector<32x64xf32>
    %c0_5 = arith.constant 0 : index
    %c0_6 = arith.constant 0 : index
    %c0_7 = arith.constant 0 : index
    %9 = vector.load %arg2[%c0_5, %c0_6, %c0_7] : memref<1x16x1xf32, #tpu.memory_space<vmem>>, vector<1x16x1xf32>
    %10 = vector.shape_cast %9 : vector<1x16x1xf32> to vector<16x1xf32>
    %11 = arith.truncf %10 : vector<16x1xf32> to vector<16x1xbf16>
    %c0_8 = arith.constant 0 : index
    %c0_9 = arith.constant 0 : index
    %12 = vector.load %arg4[%c0_8, %c0_9] : memref<32x16xf32, #tpu.memory_space<vmem>>, vector<32x16xf32>
    %13 = arith.truncf %12 : vector<32x16xf32> to vector<32x16xbf16>
    %cst_10 = arith.constant dense<0.000000e+00> : vector<32x1xf32>
    %14 = tpu.matmul %13, %11, %cst_10 {dimension_numbers = #tpu.dot_dimension_numbers<[1], [0], [0], [1], [0, 0, 1, 1], [], []>} : vector<32x16xbf16>, vector<16x1xbf16>, vector<32x1xf32> -> vector<32x1xf32>
    %15 = vector.broadcast %14 : vector<32x1xf32> to vector<32x64xf32>
    %16 = arith.addf %8, %15 : vector<32x64xf32>
    %17 = arith.index_cast %arg0 : i32 to index
    %c0_11 = arith.constant 0 : index
    %c0_12 = arith.constant 0 : index
    %18 = vector.load %arg10[%17, %c0_11, %c0_12] : memref<2x32x64xf32, #tpu.memory_space<vmem>>, vector<1x32x64xf32>
    %19 = vector.shape_cast %18 : vector<1x32x64xf32> to vector<32x64xf32>
    %20 = vector.shape_cast %16 : vector<32x64xf32> to vector<1x32x64xf32>
    tpu.vector_store %arg10[%17, %c0_11, %c0_12], %20 {strides = array<i32>} : memref<2x32x64xf32, #tpu.memory_space<vmem>>, vector<1x32x64xf32>,
    %c0_13 = arith.constant 0 : index
    %c0_14 = arith.constant 0 : index
    %21 = vector.load %arg11[%c0_13, %c0_14] : memref<32x1xf32, #tpu.memory_space<vmem>>, vector<32x1xf32>
    %cst_15 = arith.constant dense<0.000000e+00> : vector<32xf32>
    %22 = vector.multi_reduction <add>, %16, %cst_15 [1] : vector<32x64xf32> to vector<32xf32>
    %23 = vector.shape_cast %22 : vector<32xf32> to vector<32x1xf32>
    %24 = arith.addf %21, %23 : vector<32x1xf32>
    %c0_16 = arith.constant 0 : index
    %c0_17 = arith.constant 0 : index
    %25 = vector.load %arg11[%c0_16, %c0_17] : memref<32x1xf32, #tpu.memory_space<vmem>>, vector<32x1xf32>
    tpu.vector_store %arg11[%c0_16, %c0_17], %24 {strides = array<i32>} : memref<32x1xf32, #tpu.memory_space<vmem>>, vector<32x1xf32>,
    %c1_i32 = arith.constant 1 : i32
    %26 = arith.cmpi eq, %arg0, %c1_i32 : i32
    %27 = arith.extui %26 : i1 to i32
    %c0_i32_18 = arith.constant 0 : i32
    %28 = arith.cmpi ne, %27, %c0_i32_18 : i32
    scf.if %28 {
      %c0_19 = arith.constant 0 : index
      %c0_20 = arith.constant 0 : index
      %29 = vector.load %arg11[%c0_19, %c0_20] : memref<32x1xf32, #tpu.memory_space<vmem>>, vector<32x1xf32>
      %cst_21 = arith.constant 7.812500e-03 : f32
      %30 = vector.broadcast %cst_21 : f32 to vector<32x1xf32>
      %31 = arith.mulf %29, %30 : vector<32x1xf32>
      %c0_22 = arith.constant 0 : index
      %c0_23 = arith.constant 0 : index
      %c0_24 = arith.constant 0 : index
      %32 = vector.load %arg10[%c0_22, %c0_23, %c0_24] : memref<2x32x64xf32, #tpu.memory_space<vmem>>, vector<2x32x64xf32>
      %33 = vector.shape_cast %31 : vector<32x1xf32> to vector<1x32x1xf32>
      %34 = vector.broadcast %33 : vector<1x32x1xf32> to vector<2x32x64xf32>
      %35 = arith.subf %32, %34 : vector<2x32x64xf32>
      %36 = arith.mulf %35, %35 : vector<2x32x64xf32>
      %cst_25 = arith.constant dense<0.000000e+00> : vector<2x32xf32>
      %37 = vector.multi_reduction <add>, %36, %cst_25 [2] : vector<2x32x64xf32> to vector<2x32xf32>
      %38 = vector.shape_cast %37 : vector<2x32xf32> to vector<2x32x1xf32>
      %cst_26 = arith.constant dense<0.000000e+00> : vector<32x1xf32>
      %39 = vector.multi_reduction <add>, %38, %cst_26 [0] : vector<2x32x1xf32> to vector<32x1xf32>
      %cst_27 = arith.constant 7.812500e-03 : f32
      %40 = vector.broadcast %cst_27 : f32 to vector<32x1xf32>
      %41 = arith.mulf %39, %40 : vector<32x1xf32>
      %c0_28 = arith.constant 0 : index
      %c0_29 = arith.constant 0 : index
      %42 = vector.load %arg5[%c0_28, %c0_29] : memref<32x1xf32, #tpu.memory_space<vmem>>, vector<32x1xf32>
      %cst_30 = arith.constant 9.99999974E-6 : f32
      %43 = vector.broadcast %cst_30 : f32 to vector<32x1xf32>
      %44 = arith.addf %41, %43 : vector<32x1xf32>
      %45 = math.rsqrt %44 : vector<32x1xf32>
      %46 = arith.mulf %42, %45 : vector<32x1xf32>
      %47 = vector.shape_cast %46 : vector<32x1xf32> to vector<1x32x1xf32>
      %48 = vector.broadcast %47 : vector<1x32x1xf32> to vector<2x32x64xf32>
      %49 = arith.mulf %35, %48 : vector<2x32x64xf32>
      %c0_31 = arith.constant 0 : index
      %c0_32 = arith.constant 0 : index
      %50 = vector.load %arg6[%c0_31, %c0_32] : memref<32x1xf32, #tpu.memory_space<vmem>>, vector<32x1xf32>
      %51 = vector.shape_cast %50 : vector<32x1xf32> to vector<1x32x1xf32>
      %52 = vector.broadcast %51 : vector<1x32x1xf32> to vector<2x32x64xf32>
      %53 = arith.addf %49, %52 : vector<2x32x64xf32>
      %cst_33 = arith.constant 2.000000e-01 : f32
      %54 = vector.broadcast %cst_33 : f32 to vector<2x32x64xf32>
      %55 = arith.mulf %54, %53 : vector<2x32x64xf32>
      %56 = arith.maximumf %53, %55 : vector<2x32x64xf32>
      %c0_34 = arith.constant 0 : index
      %c0_35 = arith.constant 0 : index
      %57 = vector.load %arg7[%c0_34, %c0_35] : memref<32x64xf32, #tpu.memory_space<vmem>>, vector<32x64xf32>
      %58 = vector.shape_cast %57 : vector<32x64xf32> to vector<1x32x64xf32>
      %59 = vector.broadcast %58 : vector<1x32x64xf32> to vector<2x32x64xf32>
      %60 = arith.mulf %56, %59 : vector<2x32x64xf32>
      %cst_36 = arith.constant dense<0.000000e+00> : vector<2x32xf32>
      %61 = vector.multi_reduction <add>, %60, %cst_36 [2] : vector<2x32x64xf32> to vector<2x32xf32>
      %cst_37 = arith.constant dense<0.000000e+00> : vector<2xf32>
      %62 = vector.multi_reduction <add>, %61, %cst_37 [1] : vector<2x32xf32> to vector<2xf32>
      %63 = vector.shape_cast %62 : vector<2xf32> to vector<2x1xf32>
      %c0_38 = arith.constant 0 : index
      %64 = memref.load %arg8[%c0_38] : memref<1xf32, #tpu.memory_space<smem>>
      %65 = vector.broadcast %64 : f32 to vector<2x1xf32>
      %66 = arith.addf %63, %65 : vector<2x1xf32>
      %c0_39 = arith.constant 0 : index
      %c0_40 = arith.constant 0 : index
      %67 = vector.load %arg9[%c0_39, %c0_40] : memref<2x1xf32, #tpu.memory_space<vmem>>, vector<2x1xf32>
      tpu.vector_store %arg9[%c0_39, %c0_40], %66 {strides = array<i32>} : memref<2x1xf32, #tpu.memory_space<vmem>>, vector<2x1xf32>,
    } else {
    }
    return
  }
  func.func @transform_0(%arg0: i32) -> (i32, i32, i32) {
    %c0_i32 = arith.constant 0 : i32
    %c0_i32_0 = arith.constant 0 : i32
    %c0_i32_1 = arith.constant 0 : i32
    return %arg0, %c0_i32, %c0_i32_0 : i32, i32, i32
  }
  func.func @transform_1(%arg0: i32) -> (i32, i32, i32) {
    %c0_i32 = arith.constant 0 : i32
    %c0_i32_0 = arith.constant 0 : i32
    %c0_i32_1 = arith.constant 0 : i32
    return %arg0, %c0_i32, %c0_i32_0 : i32, i32, i32
  }
  func.func @transform_2(%arg0: i32) -> (i32, i32) {
    %c0_i32 = arith.constant 0 : i32
    %c0_i32_0 = arith.constant 0 : i32
    %c0_i32_1 = arith.constant 0 : i32
    return %c0_i32, %c0_i32_0 : i32, i32
  }
  func.func @transform_3(%arg0: i32) -> (i32, i32) {
    %c0_i32 = arith.constant 0 : i32
    %c0_i32_0 = arith.constant 0 : i32
    %c0_i32_1 = arith.constant 0 : i32
    return %c0_i32, %c0_i32_0 : i32, i32
  }
  func.func @transform_4(%arg0: i32) -> (i32, i32) {
    %c0_i32 = arith.constant 0 : i32
    %c0_i32_0 = arith.constant 0 : i32
    %c0_i32_1 = arith.constant 0 : i32
    return %c0_i32, %c0_i32_0 : i32, i32
  }
  func.func @transform_5(%arg0: i32) -> (i32, i32) {
    %c0_i32 = arith.constant 0 : i32
    %c0_i32_0 = arith.constant 0 : i32
    %c0_i32_1 = arith.constant 0 : i32
    return %c0_i32, %c0_i32_0 : i32, i32
  }
  func.func @transform_6(%arg0: i32) -> (i32, i32) {
    %c0_i32 = arith.constant 0 : i32
    %c0_i32_0 = arith.constant 0 : i32
    %c0_i32_1 = arith.constant 0 : i32
    return %c0_i32, %c0_i32_0 : i32, i32
  }
  func.func @transform_7(%arg0: i32) -> i32 {
    %c0_i32 = arith.constant 0 : i32
    %c0_i32_0 = arith.constant 0 : i32
    return %c0_i32 : i32
  }
  func.func @transform_8(%arg0: i32) -> (i32, i32) {
    %c0_i32 = arith.constant 0 : i32
    %c0_i32_0 = arith.constant 0 : i32
    %c0_i32_1 = arith.constant 0 : i32
    return %c0_i32, %c0_i32_0 : i32, i32
  }
}

</mosaic_0001>

<llo_original>
// kernel: tpu_custom_call.1
$region0: #{tpu_custom_call.1}
  #allocation0 [shape = 'u32[]', space=smem, size = 0x4, offset = 0x4, fixed_abs, tag = 'smem constant byte address 0x4 - core index']
  #allocation1 [shape = 'u32[144,128]{1,0:T(1,128)}', space=vmem, size = 0x12000, scoped, tag = 'internal scratch']
  #allocation2 [shape = 'f32[2,32,64]{2,1,0:T(8,128)}', space=vmem, size = 0x8000, scoped, tag = 'scratch operand']
  #allocation3 [shape = 'f32[32,1]{1,0:T(8,128)}', space=vmem, size = 0x4000, scoped, tag = 'scratch operand']
  #allocation4 [shape = 'f32[1]{0:T(128)S(6)}', space=smem, size = 0x200, scoped, tag = 'scoped memory for tpu_custom_call.1']
  %s0 = inlined_call_operand.vmem [shape: f32[2,32,64], index: 0, kind: input, shape index: {}]
  %s1 = inlined_call_operand.vmem [shape: f32[2,16,1], index: 1, kind: input, shape index: {}]
  %s2 = inlined_call_operand.vmem [shape: f32[32,32], index: 2, kind: input, shape index: {}]
  %s3 = inlined_call_operand.vmem [shape: f32[32,16], index: 3, kind: input, shape index: {}]
  %s4 = inlined_call_operand.vmem [shape: f32[32,1], index: 4, kind: input, shape index: {}]
  %s5 = inlined_call_operand.vmem [shape: f32[32,1], index: 5, kind: input, shape index: {}]
  %s6 = inlined_call_operand.vmem [shape: f32[32,64], index: 6, kind: input, shape index: {}]
  %s7 = inlined_call_operand.<no memory space> [shape: f32[1], index: 7, kind: input, shape index: {}]
  %s8 = inlined_call_operand.vmem [shape: f32[2,1], index: 8, kind: output, shape index: {}]
  %s9 = sld [smem:[#allocation0]]
  $region73: #{tpu_custom_call.1} parent=0
    _
  %s11 = ssub.s32 1, %s9
  %s12 = scalar_select 0, %s11, %s9
  %13 = sst [smem:[#allocation4]] %s7
  loop: start=0, step=1, limit=4
  $region2: #{tpu_custom_call.1} parent=0 // loop_pre_header
    _
  $region3: #{tpu_custom_call.1} parent=0 // loop_header
    %s15 = sphi 0, %s19
    %p16 = scmp.ge.s32.totalorder %s15, 4
    %s25 = sphi 0, %s27
    %s28 = sphi 0, %s25
    %s29 = sphi 0, %s28
    %s45 = sphi 0, %s29
    %s51 = sphi 0, %s53
    %s54 = sphi 0, %s51
    %s55 = sphi 0, %s54
    %s71 = sphi 0, %s55
    %s75 = sphi 0, %s75
    %s77 = sphi 0, %s75
    %s78 = sphi 0, %s77
    %s92 = sphi 0, %s78
    %s96 = sphi 0, %s96
    %s98 = sphi 0, %s96
    %s99 = sphi 0, %s98
    %s113 = sphi 0, %s99
    %s117 = sphi 0, %s117
    %s119 = sphi 0, %s117
    %s120 = sphi 0, %s119
    %s134 = sphi 0, %s120
    %s138 = sphi 0, %s138
    %s140 = sphi 0, %s138
    %s141 = sphi 0, %s140
    %s155 = sphi 0, %s141
    %s159 = sphi 0, %s159
    %s161 = sphi 0, %s159
    %s162 = sphi 0, %s161
    %s176 = sphi 0, %s162
    %s180 = sphi 0, %s180
    %s182 = sphi 0, %s180
    %s183 = sphi 0, %s182
    %s197 = sphi 0, %s183
    %s201 = sphi 0, %s201
    %s203 = sphi 0, %s201
    %s204 = sphi 0, %s203
    %s218 = sphi 0, %s204
  $region4: #{tpu_custom_call.1} parent=0 // loop_header_branch
    %18 = sbr.rel (%p16) target = $region8
  $region5: #{tpu_custom_call.1} parent=0 // loop_body
    %s20 = ssub.s32 %s15, 1
    %s21 = ssub.s32 %s15, 2
    %s22 = sadd.s32 %s15, 1
    %s23 = ssub.s32 %s15, %s22
    %p24 = scmp.eq.s32.totalorder %s23, 0
    %s26 = sadd.s32 %s25, 1
    %s27 = scalar_select %p24, %s25, %s26
    %p30 = pneg %p24
    %p31 = scmp.eq.s32.totalorder %s15, 1
    %p32 = por %p30, %p31
    %p33 = scmp.ne.s32.totalorder %s25, %s28
    %p34 = scmp.eq.s32.totalorder %s15, 0
    %p35 = por %p33, %p34
    %p36 = scmp.ne.s32.totalorder %s25, %s28
    %p37 = scmp.eq.s32.totalorder %s20, 1
    %p38 = por %p36, %p37
    %p39 = scmp.ne.s32.totalorder %s28, %s29
    %p40 = scmp.eq.s32.totalorder %s20, 0
    %p41 = por %p39, %p40
    %p42 = scmp.ne.s32.totalorder %s28, %s29
    %p43 = scmp.eq.s32.totalorder %s21, 1
    %p44 = por %p42, %p43
    %p46 = scmp.ne.s32.totalorder %s29, %s45
    %p47 = scmp.eq.s32.totalorder %s21, 0
    %p48 = por %p46, %p47
    %s49 = ssub.s32 %s15, %s22
    %p50 = scmp.eq.s32.totalorder %s49, 0
    %s52 = sadd.s32 %s51, 1
    %s53 = scalar_select %p50, %s51, %s52
    %p56 = pneg %p50
    %p57 = scmp.eq.s32.totalorder %s15, 1
    %p58 = por %p56, %p57
    %p59 = scmp.ne.s32.totalorder %s51, %s54
    %p60 = scmp.eq.s32.totalorder %s15, 0
    %p61 = por %p59, %p60
    %p62 = scmp.ne.s32.totalorder %s51, %s54
    %p63 = scmp.eq.s32.totalorder %s20, 1
    %p64 = por %p62, %p63
    %p65 = scmp.ne.s32.totalorder %s54, %s55
    %p66 = scmp.eq.s32.totalorder %s20, 0
    %p67 = por %p65, %p66
    %p68 = scmp.ne.s32.totalorder %s54, %s55
    %p69 = scmp.eq.s32.totalorder %s21, 1
    %p70 = por %p68, %p69
    %p72 = scmp.ne.s32.totalorder %s55, %s71
    %p73 = scmp.eq.s32.totalorder %s21, 0
    %p74 = por %p72, %p73
    %s76 = sadd.s32 %s75, 1
    %p79 = scmp.eq.s32.totalorder %s15, 1
    %p80 = scmp.ne.s32.totalorder %s75, %s77
    %p81 = scmp.eq.s32.totalorder %s15, 0
    %p82 = por %p80, %p81
    %p83 = scmp.ne.s32.totalorder %s75, %s77
    %p84 = scmp.eq.s32.totalorder %s20, 1
    %p85 = por %p83, %p84
    %p86 = scmp.ne.s32.totalorder %s77, %s78
    %p87 = scmp.eq.s32.totalorder %s20, 0
    %p88 = por %p86, %p87
    %p89 = scmp.ne.s32.totalorder %s77, %s78
    %p90 = scmp.eq.s32.totalorder %s21, 1
    %p91 = por %p89, %p90
    %p93 = scmp.ne.s32.totalorder %s78, %s92
    %p94 = scmp.eq.s32.totalorder %s21, 0
    %p95 = por %p93, %p94
    %s97 = sadd.s32 %s96, 1
    %p100 = scmp.eq.s32.totalorder %s15, 1
    %p101 = scmp.ne.s32.totalorder %s96, %s98
    %p102 = scmp.eq.s32.totalorder %s15, 0
    %p103 = por %p101, %p102
    %p104 = scmp.ne.s32.totalorder %s96, %s98
    %p105 = scmp.eq.s32.totalorder %s20, 1
    %p106 = por %p104, %p105
    %p107 = scmp.ne.s32.totalorder %s98, %s99
    %p108 = scmp.eq.s32.totalorder %s20, 0
    %p109 = por %p107, %p108
    %p110 = scmp.ne.s32.totalorder %s98, %s99
    %p111 = scmp.eq.s32.totalorder %s21, 1
    %p112 = por %p110, %p111
    %p114 = scmp.ne.s32.totalorder %s99, %s113
    %p115 = scmp.eq.s32.totalorder %s21, 0
    %p116 = por %p114, %p115
    %s118 = sadd.s32 %s117, 1
    %p121 = scmp.eq.s32.totalorder %s15, 1
    %p122 = scmp.ne.s32.totalorder %s117, %s119
    %p123 = scmp.eq.s32.totalorder %s15, 0
    %p124 = por %p122, %p123
    %p125 = scmp.ne.s32.totalorder %s117, %s119
    %p126 = scmp.eq.s32.totalorder %s20, 1
    %p127 = por %p125, %p126
    %p128 = scmp.ne.s32.totalorder %s119, %s120
    %p129 = scmp.eq.s32.totalorder %s20, 0
    %p130 = por %p128, %p129
    %p131 = scmp.ne.s32.totalorder %s119, %s120
    %p132 = scmp.eq.s32.totalorder %s21, 1
    %p133 = por %p131, %p132
    %p135 = scmp.ne.s32.totalorder %s120, %s134
    %p136 = scmp.eq.s32.totalorder %s21, 0
    %p137 = por %p135, %p136
    %s139 = sadd.s32 %s138, 1
    %p142 = scmp.eq.s32.totalorder %s15, 1
    %p143 = scmp.ne.s32.totalorder %s138, %s140
    %p144 = scmp.eq.s32.totalorder %s15, 0
    %p145 = por %p143, %p144
    %p146 = scmp.ne.s32.totalorder %s138, %s140
    %p147 = scmp.eq.s32.totalorder %s20, 1
    %p148 = por %p146, %p147
    %p149 = scmp.ne.s32.totalorder %s140, %s141
    %p150 = scmp.eq.s32.totalorder %s20, 0
    %p151 = por %p149, %p150
    %p152 = scmp.ne.s32.totalorder %s140, %s141
    %p153 = scmp.eq.s32.totalorder %s21, 1
    %p154 = por %p152, %p153
    %p156 = scmp.ne.s32.totalorder %s141, %s155
    %p157 = scmp.eq.s32.totalorder %s21, 0
    %p158 = por %p156, %p157
    %s160 = sadd.s32 %s159, 1
    %p163 = scmp.eq.s32.totalorder %s15, 1
    %p164 = scmp.ne.s32.totalorder %s159, %s161
    %p165 = scmp.eq.s32.totalorder %s15, 0
    %p166 = por %p164, %p165
    %p167 = scmp.ne.s32.totalorder %s159, %s161
    %p168 = scmp.eq.s32.totalorder %s20, 1
    %p169 = por %p167, %p168
    %p170 = scmp.ne.s32.totalorder %s161, %s162
    %p171 = scmp.eq.s32.totalorder %s20, 0
    %p172 = por %p170, %p171
    %p173 = scmp.ne.s32.totalorder %s161, %s162
    %p174 = scmp.eq.s32.totalorder %s21, 1
    %p175 = por %p173, %p174
    %p177 = scmp.ne.s32.totalorder %s162, %s176
    %p178 = scmp.eq.s32.totalorder %s21, 0
    %p179 = por %p177, %p178
    %s181 = sadd.s32 %s180, 1
    %p184 = scmp.eq.s32.totalorder %s15, 1
    %p185 = scmp.ne.s32.totalorder %s180, %s182
    %p186 = scmp.eq.s32.totalorder %s15, 0
    %p187 = por %p185, %p186
    %p188 = scmp.ne.s32.totalorder %s180, %s182
    %p189 = scmp.eq.s32.totalorder %s20, 1
    %p190 = por %p188, %p189
    %p191 = scmp.ne.s32.totalorder %s182, %s183
    %p192 = scmp.eq.s32.totalorder %s20, 0
    %p193 = por %p191, %p192
    %p194 = scmp.ne.s32.totalorder %s182, %s183
    %p195 = scmp.eq.s32.totalorder %s21, 1
    %p196 = por %p194, %p195
    %p198 = scmp.ne.s32.totalorder %s183, %s197
    %p199 = scmp.eq.s32.totalorder %s21, 0
    %p200 = por %p198, %p199
    %s202 = sadd.s32 %s201, 1
    %p205 = scmp.eq.s32.totalorder %s15, 1
    %p206 = scmp.ne.s32.totalorder %s201, %s203
    %p207 = scmp.eq.s32.totalorder %s15, 0
    %p208 = por %p206, %p207
    %p209 = scmp.ne.s32.totalorder %s201, %s203
    %p210 = scmp.eq.s32.totalorder %s20, 1
    %p211 = por %p209, %p210
    %p212 = scmp.ne.s32.totalorder %s203, %s204
    %p213 = scmp.eq.s32.totalorder %s20, 0
    %p214 = por %p212, %p213
    %p215 = scmp.ne.s32.totalorder %s203, %s204
    %p216 = scmp.eq.s32.totalorder %s21, 1
    %p217 = por %p215, %p216
    %p219 = scmp.ne.s32.totalorder %s204, %s218
    %p220 = scmp.eq.s32.totalorder %s21, 0
    %p221 = por %p219, %p220
    %p222 = scmp.le.s32.totalorder 1, %s15
    %p223 = scmp.lt.s32.totalorder %s15, 3
    %p224 = pnand %p222, %p223
    %p225 = pneg %p224
    // Predicated region
    $region9: #{tpu_custom_call.1} parent=5 // pred_check
      _
    $region10: #{tpu_custom_call.1} parent=5 // pred_check_branch
      %227 = sbr.rel (%p224) target = $region12
    $region11: #{tpu_custom_call.1} parent=5 // pred_region
      %s228 = ssub.s32 %s15, 1
      // Predicated region
      $region13: #{tpu_custom_call.1} parent=11 // pred_check
        %p229 = pneg %p88
      $region14: #{tpu_custom_call.1} parent=11 // pred_check_branch
        %231 = sbr.rel (%p229) target = $region16
      $region15: #{tpu_custom_call.1} parent=11 // pred_region
        _
      $region16: #{tpu_custom_call.1} parent=11 // pred_fallthru
        _
      // Predicated region
      $region17: #{tpu_custom_call.1} parent=11 // pred_check
        %p232 = pneg %p109
      $region18: #{tpu_custom_call.1} parent=11 // pred_check_branch
        %234 = sbr.rel (%p232) target = $region20
      $region19: #{tpu_custom_call.1} parent=11 // pred_region
        _
      $region20: #{tpu_custom_call.1} parent=11 // pred_fallthru
        _
      // Predicated region
      $region21: #{tpu_custom_call.1} parent=11 // pred_check
        %p235 = pneg %p130
      $region22: #{tpu_custom_call.1} parent=11 // pred_check_branch
        %237 = sbr.rel (%p235) target = $region24
      $region23: #{tpu_custom_call.1} parent=11 // pred_region
        _
      $region24: #{tpu_custom_call.1} parent=11 // pred_fallthru
        _
      // Predicated region
      $region25: #{tpu_custom_call.1} parent=11 // pred_check
        %p238 = pneg %p151
      $region26: #{tpu_custom_call.1} parent=11 // pred_check_branch
        %240 = sbr.rel (%p238) target = $region28
      $region27: #{tpu_custom_call.1} parent=11 // pred_region
        _
      $region28: #{tpu_custom_call.1} parent=11 // pred_fallthru
        _
      // Predicated region
      $region29: #{tpu_custom_call.1} parent=11 // pred_check
        %p241 = pneg %p172
      $region30: #{tpu_custom_call.1} parent=11 // pred_check_branch
        %243 = sbr.rel (%p241) target = $region32
      $region31: #{tpu_custom_call.1} parent=11 // pred_region
        _
      $region32: #{tpu_custom_call.1} parent=11 // pred_fallthru
        _
      // Predicated region
      $region33: #{tpu_custom_call.1} parent=11 // pred_check
        %p244 = pneg %p193
      $region34: #{tpu_custom_call.1} parent=11 // pred_check_branch
        %246 = sbr.rel (%p244) target = $region36
      $region35: #{tpu_custom_call.1} parent=11 // pred_region
        _
      $region36: #{tpu_custom_call.1} parent=11 // pred_fallthru
        _
    $region12: #{tpu_custom_call.1} parent=5 // pred_fallthru
      _
    %p247 = scmp.lt.s32.totalorder %s15, 2
    // Predicated region
    $region37: #{tpu_custom_call.1} parent=5 // pred_check
      %p248 = pneg %p247
    $region38: #{tpu_custom_call.1} parent=5 // pred_check_branch
      %250 = sbr.rel (%p248) target = $region40
    $region39: #{tpu_custom_call.1} parent=5 // pred_region
      // Predicated region
      $region41: #{tpu_custom_call.1} parent=39 // pred_check
        %p251 = pneg %p35
      $region42: #{tpu_custom_call.1} parent=39 // pred_check_branch
        %253 = sbr.rel (%p251) target = $region44
      $region43: #{tpu_custom_call.1} parent=39 // pred_region
        %p254 = scmp.lt.s32.totalorder %s15, 1
        %s255 = scalar_select %p254, %s15, 1
        %s256 = smul.addr %s255, 4
        %s257 = smul.addr %s256, 8
        %s258 = scalar_lea.vmem %s0, %s257
      $region44: #{tpu_custom_call.1} parent=39 // pred_fallthru
        _
      // Predicated region
      $region45: #{tpu_custom_call.1} parent=39 // pred_check
        %p259 = pneg %p61
      $region46: #{tpu_custom_call.1} parent=39 // pred_check_branch
        %261 = sbr.rel (%p259) target = $region48
      $region47: #{tpu_custom_call.1} parent=39 // pred_region
        %p262 = scmp.lt.s32.totalorder %s15, 1
        %s263 = scalar_select %p262, %s15, 1
        %s264 = smul.addr %s263, 2
        %s265 = smul.addr %s264, 8
        %s266 = scalar_lea.vmem %s1, %s265
      $region48: #{tpu_custom_call.1} parent=39 // pred_fallthru
        _
    $region40: #{tpu_custom_call.1} parent=5 // pred_fallthru
      _
    %p267 = scmp.le.s32.totalorder 1, %s15
    %p268 = scmp.lt.s32.totalorder %s15, 3
    %p269 = pnand %p267, %p268
    %p270 = pneg %p269
    // Predicated region
    $region49: #{tpu_custom_call.1} parent=5 // pred_check
      _
    $region50: #{tpu_custom_call.1} parent=5 // pred_check_branch
      %272 = sbr.rel (%p269) target = $region52
    $region51: #{tpu_custom_call.1} parent=5 // pred_region
      %s273 = ssub.s32 %s15, 1
      %p274 = scmp.lt.s32.totalorder %s20, 1
      %s275 = scalar_select %p274, %s20, 1
      %s276 = smul.addr %s275, 4
      %s277 = smul.addr %s276, 8
      %s278 = scalar_lea.vmem %s0, %s277
      %p279 = pneg %p41
      %p280 = pneg %p38
      %p281 = scmp.lt.s32.totalorder %s20, 1
      %s282 = scalar_select %p281, %s20, 1
      %s283 = smul.addr %s282, 2
      %s284 = smul.addr %s283, 8
      %s285 = scalar_lea.vmem %s1, %s284
      %p286 = pneg %p67
      %p287 = pneg %p64
      %p288 = pneg %p88
      %p289 = pneg %p85
      %p290 = pneg %p109
      %p291 = pneg %p106
      %p292 = pneg %p130
      %p293 = pneg %p127
      %p294 = pneg %p151
      %p295 = pneg %p148
      %p296 = pneg %p172
      %p297 = pneg %p169
      %p298 = pneg %p193
      %p299 = pneg %p190
      %p300 = pneg %p214
      %p301 = pneg %p211
      %p302 = scmp.lt.s32.totalorder %s20, 1
      %s303 = scalar_select %p302, %s20, 1
      %s304 = smul.addr %s303, 4
      %s305 = smul.addr %s304, 8
      %s306 = scalar_lea.vmem %s0, %s305
      %p307 = scmp.lt.s32.totalorder %s20, 1
      %s308 = scalar_select %p307, %s20, 1
      %s309 = smul.addr %s308, 2
      %s310 = smul.addr %s309, 8
      %s311 = scalar_lea.vmem %s1, %s310
      %p313 = scmp.eq.s32.totalorder %s20, 0
      // Predicated region
      $region53: #{tpu_custom_call.1} parent=51 // pred_check
        %p314 = pneg %p313
      $region54: #{tpu_custom_call.1} parent=51 // pred_check_branch
        %316 = sbr.rel (%p314) target = $region56
      $region55: #{tpu_custom_call.1} parent=51 // pred_region
        %vm317 = vcmask 7168
        %318 = vst.msk [vmem:[#allocation3] sm:$0xff] %vm317, 0.0
        %319 = vst.msk [vmem:[#allocation3 + $0x8] sm:$0xff] %vm317, 0.0
        %320 = vst.msk [vmem:[#allocation3 + $0x10] sm:$0xff] %vm317, 0.0
        %321 = vst.msk [vmem:[#allocation3 + $0x18] sm:$0xff] %vm317, 0.0
      $region56: #{tpu_custom_call.1} parent=51 // pred_fallthru
        _
      %v322 = vld [vmem:[%s306] sm:$0xff]
      %v323 = vld [vmem:[%s306 + $0x8] sm:$0xff]
      %v324 = vld [vmem:[%s306 + $0x10] sm:$0xff]
      %v325 = vld [vmem:[%s306 + $0x18] sm:$0xff]
      %v326 = vpack.c.bf16 %v323, %v322
      %v327 = vpack.c.bf16 %v325, %v324
      %v328 = vld [vmem:[%s2] sm:$0xff]
      %v329 = vld [vmem:[%s2 + $0x8] sm:$0xff]
      %v330 = vld [vmem:[%s2 + $0x10] sm:$0xff]
      %v331 = vld [vmem:[%s2 + $0x18] sm:$0xff]
      %v332 = vpack.c.bf16 %v329, %v328
      %v333 = vpack.c.bf16 %v331, %v330
      %v334 = vld [vmem:[%s311] sm:$0xff]
      %v335 = vld [vmem:[%s311 + $0x8] sm:$0xff]
      %v336 = vpack.c.bf16 %v335, %v334
      %v337 = vld [vmem:[%s3] sm:$0xff]
      %v338 = vld [vmem:[%s3 + $0x8] sm:$0xff]
      %v339 = vld [vmem:[%s3 + $0x10] sm:$0xff]
      %v340 = vld [vmem:[%s3 + $0x18] sm:$0xff]
      %v341 = vpack.c.bf16 %v338, %v337
      %v342 = vpack.c.bf16 %v340, %v339
      %vm343 = vcmask 130048
      %v345 = vsel %vm343, %v341, 0
      %v348 = vsel %vm343, %v342, 0
      %350 = vmatprep.subr.bf16.mxu0 0
      %351 = vmatpush1.bf16.msra.mxu0 0
      %352 = vmatprep.subr.bf16.mxu0 0
      %353 = vmatpush1.bf16.msra.mxu0 0
      %354 = vmatprep.subr.bf16.mxu0 0
      %355 = vmatpush1.bf16.msra.mxu0 0
      %356 = vmatprep.subr.bf16.mxu0 0
      %357 = vmatpush1.bf16.msra.mxu0 0
      %358 = vmatprep.subr.bf16.mxu0 0
      %359 = vmatpush1.bf16.msra.mxu0 0
      %360 = vmatprep.subr.bf16.mxu0 0
      %361 = vmatpush1.bf16.msra.mxu0 0
      %362 = vmatprep.subr.bf16.mxu0 0
      %363 = vmatpush1.bf16.msra.mxu0 0
      %364 = vmatprep.subr.bf16.mxu0 0
      %365 = vmatpush1.bf16.msra.mxu0 %v336
      %366 = vmatprep.subr.bf16.mxu0 0
      %367 = vmatpush2.bf16.msra.mxu0 0
      %368 = vmatprep.subr.bf16.mxu0 0
      %369 = vmatpush2.bf16.msra.mxu0 0
      %370 = vmatprep.subr.bf16.mxu0 0
      %371 = vmatpush2.bf16.msra.mxu0 0
      %372 = vmatprep.subr.bf16.mxu0 0
      %373 = vmatpush2.bf16.msra.mxu0 0
      %374 = vmatprep.subr.bf16.mxu0 0
      %375 = vmatpush2.bf16.msra.mxu0 0
      %376 = vmatprep.subr.bf16.mxu0 0
      %377 = vmatpush2.bf16.msra.mxu0 0
      %378 = vmatprep.subr.bf16.mxu0 0
      %379 = vmatpush2.bf16.msra.mxu0 0
      %380 = vmatprep.subr.bf16.mxu0 0
      %381 = vmatpush2.bf16.msra.mxu0 0
      %382 = vmatprep.mubr.bf16.mxu0 0
      %383 = vmatmul.mubr.bf16.gmra.mxu0 %v345
      %v384 = vpop.f32.mrf.mxu0
      %v385 = vadd.f32 0.0, %v384
      %v386 = vpop.f32.mrf.mxu0
      %v387 = vpop.f32.mrf.mxu0
      %v388 = vadd.f32 0.0, %v387
      %v389 = vpop.f32.mrf.mxu0
      %390 = vmatprep.mubr.bf16.mxu0 0
      %391 = vmatmul.mubr.bf16.gmra.mxu0 %v348
      %v392 = vpop.f32.mrf.mxu0
      %v393 = vadd.f32 0.0, %v392
      %v394 = vpop.f32.mrf.mxu0
      %v395 = vpop.f32.mrf.mxu0
      %v396 = vadd.f32 0.0, %v395
      %v397 = vpop.f32.mrf.mxu0
      %398 = vdwg.mxu0
      %400 = vset.pattern.permute.xlu0 0
      %401 = vperm.xlu0 %400, %v385
      %v402 = vpop.permute.xlu0 %401
      %405 = vset.pattern.permute.xlu0 0
      %406 = vperm.xlu0 %405, %v388
      %v407 = vpop.permute.xlu0 %406
      %410 = vset.pattern.permute.xlu0 0
      %411 = vperm.xlu0 %410, %v393
      %v412 = vpop.permute.xlu0 %411
      %415 = vset.pattern.permute.xlu0 0
      %416 = vperm.xlu0 %415, %v396
      %v417 = vpop.permute.xlu0 %416
      %vm419 = vcmask 261120
      %v421 = vsel %vm419, %v332, 0
      %v424 = vsel %vm419, %v333, 0
      %426 = vmatprep.subr.bf16.mxu0 0
      %427 = vmatpush1.bf16.msra.mxu0 0
      %428 = vmatprep.subr.bf16.mxu0 0
      %429 = vmatpush1.bf16.msra.mxu0 0
      %430 = vmatprep.subr.bf16.mxu0 0
      %431 = vmatpush1.bf16.msra.mxu0 0
      %432 = vmatprep.subr.bf16.mxu0 0
      %433 = vmatpush1.bf16.msra.mxu0 0
      %434 = vmatprep.subr.bf16.mxu0 0
      %435 = vmatpush1.bf16.msra.mxu0 0
      %436 = vmatprep.subr.bf16.mxu0 0
      %437 = vmatpush1.bf16.msra.mxu0 0
      %438 = vmatprep.subr.bf16.mxu0 0
      %439 = vmatpush1.bf16.msra.mxu0 %v327
      %440 = vmatprep.subr.bf16.mxu0 0
      %441 = vmatpush1.bf16.msra.mxu0 %v326
      %442 = vmatprep.subr.bf16.mxu0 0
      %443 = vmatpush2.bf16.msra.mxu0 0
      %444 = vmatprep.subr.bf16.mxu0 0
      %445 = vmatpush2.bf16.msra.mxu0 0
      %446 = vmatprep.subr.bf16.mxu0 0
      %447 = vmatpush2.bf16.msra.mxu0 0
      %448 = vmatprep.subr.bf16.mxu0 0
      %449 = vmatpush2.bf16.msra.mxu0 0
      %450 = vmatprep.subr.bf16.mxu0 0
      %451 = vmatpush2.bf16.msra.mxu0 0
      %452 = vmatprep.subr.bf16.mxu0 0
      %453 = vmatpush2.bf16.msra.mxu0 0
      %454 = vmatprep.subr.bf16.mxu0 0
      %455 = vmatpush2.bf16.msra.mxu0 0
      %456 = vmatprep.subr.bf16.mxu0 0
      %457 = vmatpush2.bf16.msra.mxu0 0
      %458 = vmatprep.mubr.bf16.mxu0 0
      %459 = vmatmul.mubr.bf16.gmra.mxu0 %v421
      %v460 = vpop.f32.mrf.mxu0
      %v461 = vadd.f32 %v402, %v460
      %v462 = vpop.f32.mrf.mxu0
      %v463 = vpop.f32.mrf.mxu0
      %v464 = vadd.f32 %v407, %v463
      %v465 = vpop.f32.mrf.mxu0
      %466 = vmatprep.mubr.bf16.mxu0 0
      %467 = vmatmul.mubr.bf16.gmra.mxu0 %v424
      %v468 = vpop.f32.mrf.mxu0
      %v469 = vadd.f32 %v412, %v468
      %v470 = vpop.f32.mrf.mxu0
      %v471 = vpop.f32.mrf.mxu0
      %v472 = vadd.f32 %v417, %v471
      %v473 = vpop.f32.mrf.mxu0
      %474 = vdwg.mxu0
      %s475 = smul.u32 %s20, 32
      %s476 = scalar_lea.vmem [#allocation2], %s475
      %vm477 = vcmask 523264
      %478 = vst.msk [vmem:[%s476] sm:$0xff] %vm477, %v461
      %479 = vst.msk [vmem:[%s476 + $0x8] sm:$0xff] %vm477, %v464
      %480 = vst.msk [vmem:[%s476 + $0x10] sm:$0xff] %vm477, %v469
      %481 = vst.msk [vmem:[%s476 + $0x18] sm:$0xff] %vm477, %v472
      %v482 = vld [vmem:[#allocation3] sm:$0xff]
      %v483 = vld [vmem:[#allocation3 + $0x8] sm:$0xff]
      %v484 = vld [vmem:[#allocation3 + $0x10] sm:$0xff]
      %v485 = vld [vmem:[#allocation3 + $0x18] sm:$0xff]
      %v486 = vsel %vm477, %v461, 0.0
      %487 = vadd.xlane.f32.xlu0 %v486
      %v488 = vpop.xlane.xlu0 %487
      %v489 = vsel %vm477, %v464, 0.0
      %490 = vadd.xlane.f32.xlu0 %v489
      %v491 = vpop.xlane.xlu0 %490
      %v492 = vsel %vm477, %v469, 0.0
      %493 = vadd.xlane.f32.xlu0 %v492
      %v494 = vpop.xlane.xlu0 %493
      %v495 = vsel %vm477, %v472, 0.0
      %496 = vadd.xlane.f32.xlu0 %v495
      %v497 = vpop.xlane.xlu0 %496
      %v498 = vadd.f32 %v482, %v488
      %v499 = vadd.f32 %v483, %v491
      %v500 = vadd.f32 %v484, %v494
      %v501 = vadd.f32 %v485, %v497
      %vm502 = vcmask 7168
      %503 = vst.msk [vmem:[#allocation3] sm:$0xff] %vm502, %v498
      %504 = vst.msk [vmem:[#allocation3 + $0x8] sm:$0xff] %vm502, %v499
      %505 = vst.msk [vmem:[#allocation3 + $0x10] sm:$0xff] %vm502, %v500
      %506 = vst.msk [vmem:[#allocation3 + $0x18] sm:$0xff] %vm502, %v501
      %p507 = scmp.eq.s32.totalorder %s20, 1
      // Predicated region
      $region57: #{tpu_custom_call.1} parent=51 // pred_check
        %p508 = pneg %p507
      $region58: #{tpu_custom_call.1} parent=51 // pred_check_branch
        %510 = sbr.rel (%p508) target = $region60
      $region59: #{tpu_custom_call.1} parent=51 // pred_region
        %v511 = vld [vmem:[#allocation3] sm:$0xff]
        %v512 = vld [vmem:[#allocation3 + $0x8] sm:$0xff]
        %v513 = vld [vmem:[#allocation3 + $0x10] sm:$0xff]
        %v514 = vld [vmem:[#allocation3 + $0x18] sm:$0xff]
        %v515 = vmul.f32 %v511, 0.0078125
        %v516 = vmul.f32 %v512, 0.0078125
        %v517 = vmul.f32 %v513, 0.0078125
        %v518 = vmul.f32 %v514, 0.0078125
        %v519 = vld [vmem:[#allocation2] sm:$0xff]
        %v520 = vld [vmem:[#allocation2 + $0x8] sm:$0xff]
        %v521 = vld [vmem:[#allocation2 + $0x10] sm:$0xff]
        %v522 = vld [vmem:[#allocation2 + $0x18] sm:$0xff]
        %v523 = vld [vmem:[#allocation2 + $0x20] sm:$0xff]
        %v524 = vld [vmem:[#allocation2 + $0x28] sm:$0xff]
        %v525 = vld [vmem:[#allocation2 + $0x30] sm:$0xff]
        %v526 = vld [vmem:[#allocation2 + $0x38] sm:$0xff]
        %528 = vset.pattern.permute.xlu0 0
        %529 = vperm.xlu0 %528, %v515
        %v530 = vpop.permute.xlu0 %529
        %533 = vset.pattern.permute.xlu0 0
        %534 = vperm.xlu0 %533, %v516
        %v535 = vpop.permute.xlu0 %534
        %538 = vset.pattern.permute.xlu0 0
        %539 = vperm.xlu0 %538, %v517
        %v540 = vpop.permute.xlu0 %539
        %543 = vset.pattern.permute.xlu0 0
        %544 = vperm.xlu0 %543, %v518
        %v545 = vpop.permute.xlu0 %544
        %v547 = vsub.f32 %v519, %v530
        %v548 = vsub.f32 %v520, %v535
        %v549 = vsub.f32 %v521, %v540
        %v550 = vsub.f32 %v522, %v545
        %v551 = vsub.f32 %v523, %v530
        %v552 = vsub.f32 %v524, %v535
        %v553 = vsub.f32 %v525, %v540
        %v554 = vsub.f32 %v526, %v545
        %v555 = vmul.f32 %v547, %v547
        %v556 = vmul.f32 %v548, %v548
        %v557 = vmul.f32 %v549, %v549
        %v558 = vmul.f32 %v550, %v550
        %v559 = vmul.f32 %v551, %v551
        %v560 = vmul.f32 %v552, %v552
        %v561 = vmul.f32 %v553, %v553
        %v562 = vmul.f32 %v554, %v554
        %v563 = vsel %vm477, %v555, 0.0
        %564 = vadd.xlane.f32.xlu0 %v563
        %v565 = vpop.xlane.xlu0 %564
        %v566 = vsel %vm477, %v556, 0.0
        %567 = vadd.xlane.f32.xlu0 %v566
        %v568 = vpop.xlane.xlu0 %567
        %v569 = vsel %vm477, %v557, 0.0
        %570 = vadd.xlane.f32.xlu0 %v569
        %v571 = vpop.xlane.xlu0 %570
        %v572 = vsel %vm477, %v558, 0.0
        %573 = vadd.xlane.f32.xlu0 %v572
        %v574 = vpop.xlane.xlu0 %573
        %v575 = vsel %vm477, %v559, 0.0
        %576 = vadd.xlane.f32.xlu0 %v575
        %v577 = vpop.xlane.xlu0 %576
        %v578 = vsel %vm477, %v560, 0.0
        %579 = vadd.xlane.f32.xlu0 %v578
        %v580 = vpop.xlane.xlu0 %579
        %v581 = vsel %vm477, %v561, 0.0
        %582 = vadd.xlane.f32.xlu0 %v581
        %v583 = vpop.xlane.xlu0 %582
        %v584 = vsel %vm477, %v562, 0.0
        %585 = vadd.xlane.f32.xlu0 %v584
        %v586 = vpop.xlane.xlu0 %585
        %v587 = vadd.f32 %v565, %v577
        %v588 = vadd.f32 %v568, %v580
        %v589 = vadd.f32 %v571, %v583
        %v590 = vadd.f32 %v574, %v586
        %v591 = vmul.f32 %v587, 0.0078125
        %v592 = vmul.f32 %v588, 0.0078125
        %v593 = vmul.f32 %v589, 0.0078125
        %v594 = vmul.f32 %v590, 0.0078125
        %v595 = vld [vmem:[%s4] sm:$0xff]
        %v596 = vld [vmem:[%s4 + $0x8] sm:$0xff]
        %v597 = vld [vmem:[%s4 + $0x10] sm:$0xff]
        %v598 = vld [vmem:[%s4 + $0x18] sm:$0xff]
        %v599 = vadd.f32 %v591, 1e-05
        %v600 = vadd.f32 %v592, 1e-05
        %v601 = vadd.f32 %v593, 1e-05
        %v602 = vadd.f32 %v594, 1e-05
        %v603 = vrsqrt.pop %v599
        %v604 = vrsqrt.pop %v600
        %v605 = vrsqrt.pop %v601
        %v606 = vrsqrt.pop %v602
        %v607 = vmul.f32 %v595, %v603
        %v608 = vmul.f32 %v596, %v604
        %v609 = vmul.f32 %v597, %v605
        %v610 = vmul.f32 %v598, %v606
        %612 = vset.pattern.permute.xlu0 0
        %613 = vperm.xlu0 %612, %v607
        %v614 = vpop.permute.xlu0 %613
        %617 = vset.pattern.permute.xlu0 0
        %618 = vperm.xlu0 %617, %v608
        %v619 = vpop.permute.xlu0 %618
        %622 = vset.pattern.permute.xlu0 0
        %623 = vperm.xlu0 %622, %v609
        %v624 = vpop.permute.xlu0 %623
        %627 = vset.pattern.permute.xlu0 0
        %628 = vperm.xlu0 %627, %v610
        %v629 = vpop.permute.xlu0 %628
        %v631 = vmul.f32 %v547, %v614
        %v632 = vmul.f32 %v548, %v619
        %v633 = vmul.f32 %v549, %v624
        %v634 = vmul.f32 %v550, %v629
        %v635 = vmul.f32 %v551, %v614
        %v636 = vmul.f32 %v552, %v619
        %v637 = vmul.f32 %v553, %v624
        %v638 = vmul.f32 %v554, %v629
        %v639 = vld [vmem:[%s5] sm:$0xff]
        %v640 = vld [vmem:[%s5 + $0x8] sm:$0xff]
        %v641 = vld [vmem:[%s5 + $0x10] sm:$0xff]
        %v642 = vld [vmem:[%s5 + $0x18] sm:$0xff]
        %644 = vset.pattern.permute.xlu0 0
        %645 = vperm.xlu0 %644, %v639
        %v646 = vpop.permute.xlu0 %645
        %649 = vset.pattern.permute.xlu0 0
        %650 = vperm.xlu0 %649, %v640
        %v651 = vpop.permute.xlu0 %650
        %654 = vset.pattern.permute.xlu0 0
        %655 = vperm.xlu0 %654, %v641
        %v656 = vpop.permute.xlu0 %655
        %659 = vset.pattern.permute.xlu0 0
        %660 = vperm.xlu0 %659, %v642
        %v661 = vpop.permute.xlu0 %660
        %v663 = vadd.f32 %v631, %v646
        %v664 = vadd.f32 %v632, %v651
        %v665 = vadd.f32 %v633, %v656
        %v666 = vadd.f32 %v634, %v661
        %v667 = vadd.f32 %v635, %v646
        %v668 = vadd.f32 %v636, %v651
        %v669 = vadd.f32 %v637, %v656
        %v670 = vadd.f32 %v638, %v661
        %v671 = vmul.f32 %v663, 0.2
        %v672 = vmul.f32 %v664, 0.2
        %v673 = vmul.f32 %v665, 0.2
        %v674 = vmul.f32 %v666, 0.2
        %v675 = vmul.f32 %v667, 0.2
        %v676 = vmul.f32 %v668, 0.2
        %v677 = vmul.f32 %v669, 0.2
        %v678 = vmul.f32 %v670, 0.2
        %v679 = vmax.f32 %v663, %v671
        %v680 = vmax.f32 %v664, %v672
        %v681 = vmax.f32 %v665, %v673
        %v682 = vmax.f32 %v666, %v674
        %v683 = vmax.f32 %v667, %v675
        %v684 = vmax.f32 %v668, %v676
        %v685 = vmax.f32 %v669, %v677
        %v686 = vmax.f32 %v670, %v678
        %v687 = vld [vmem:[%s6] sm:$0xff]
        %v688 = vld [vmem:[%s6 + $0x8] sm:$0xff]
        %v689 = vld [vmem:[%s6 + $0x10] sm:$0xff]
        %v690 = vld [vmem:[%s6 + $0x18] sm:$0xff]
        %v691 = vmul.f32 %v679, %v687
        %v692 = vmul.f32 %v680, %v688
        %v693 = vmul.f32 %v681, %v689
        %v694 = vmul.f32 %v682, %v690
        %v695 = vmul.f32 %v683, %v687
        %v696 = vmul.f32 %v684, %v688
        %v697 = vmul.f32 %v685, %v689
        %v698 = vmul.f32 %v686, %v690
        %v699 = vsel %vm477, %v691, 0.0
        %700 = vadd.xlane.f32.xlu0 %v699
        %v701 = vpop.xlane.xlu0 %700
        %v702 = vsel %vm477, %v692, 0.0
        %703 = vadd.xlane.f32.xlu0 %v702
        %v704 = vpop.xlane.xlu0 %703
        %v705 = vsel %vm477, %v693, 0.0
        %706 = vadd.xlane.f32.xlu0 %v705
        %v707 = vpop.xlane.xlu0 %706
        %v708 = vsel %vm477, %v694, 0.0
        %709 = vadd.xlane.f32.xlu0 %v708
        %v710 = vpop.xlane.xlu0 %709
        %v711 = vsel %vm477, %v695, 0.0
        %712 = vadd.xlane.f32.xlu0 %v711
        %v713 = vpop.xlane.xlu0 %712
        %v714 = vsel %vm477, %v696, 0.0
        %715 = vadd.xlane.f32.xlu0 %v714
        %v716 = vpop.xlane.xlu0 %715
        %v717 = vsel %vm477, %v697, 0.0
        %718 = vadd.xlane.f32.xlu0 %v717
        %v719 = vpop.xlane.xlu0 %718
        %v720 = vsel %vm477, %v698, 0.0
        %721 = vadd.xlane.f32.xlu0 %v720
        %v722 = vpop.xlane.xlu0 %721
        %v731 = vlaneseq
        %v732 = vand.u32 %v731, 127
        %v733 = vlaneseq
        %v734 = vshrl.u32 %v733, 7
        %v735 = vsub.s32 %v732, %v734
        %v736 = vrot.slane %v701, %v735
        %v737 = vadd.s32 %v732, 4294967288
        %v738 = vlaneseq
        %v739 = vshrl.u32 %v738, 7
        %v740 = vsub.s32 %v737, %v739
        %v741 = vrot.slane %v704, %v740
        %vm742 = vcmask 130112
        %v743 = vsel %vm742, %v741, %v736
        %v744 = vadd.s32 %v732, 4294967280
        %v745 = vlaneseq
        %v746 = vshrl.u32 %v745, 7
        %v747 = vsub.s32 %v744, %v746
        %v748 = vrot.slane %v707, %v747
        %vm749 = vcmask 195712
        %v750 = vsel %vm749, %v748, %v743
        %v751 = vadd.s32 %v732, 4294967272
        %v752 = vlaneseq
        %v753 = vshrl.u32 %v752, 7
        %v754 = vsub.s32 %v751, %v753
        %v755 = vrot.slane %v710, %v754
        %vm756 = vcmask 261312
        %v757 = vsel %vm756, %v755, %v750
        %v758 = vlaneseq
        %v759 = vshrl.u32 %v758, 7
        %v760 = vsub.s32 %v732, %v759
        %v761 = vrot.slane %v713, %v760
        %v762 = vlaneseq
        %v763 = vshrl.u32 %v762, 7
        %v764 = vsub.s32 %v737, %v763
        %v765 = vrot.slane %v716, %v764
        %v766 = vsel %vm742, %v765, %v761
        %v767 = vlaneseq
        %v768 = vshrl.u32 %v767, 7
        %v769 = vsub.s32 %v744, %v768
        %v770 = vrot.slane %v719, %v769
        %v771 = vsel %vm749, %v770, %v766
        %v772 = vlaneseq
        %v773 = vshrl.u32 %v772, 7
        %v774 = vsub.s32 %v751, %v773
        %v775 = vrot.slane %v722, %v774
        %v776 = vsel %vm756, %v775, %v771
        %vm777 = vcmask 1041409
        %v778 = vsel %vm777, %v776, %v757
        %vm780 = vcmask 254976
        %v781 = vsel %vm780, %v778, 0.0
        %782 = vadd.xlane.f32.xlu0 %v781
        %v783 = vpop.xlane.xlu0 %782
        %s784 = sld [smem:[#allocation4]]
        %v785 = vstv %s784
        %v786 = vadd.f32 %v783, %v785
        %vm787 = vcmask 1024
        %788 = vst.msk [vmem:[%s8] sm:$0x3] %vm787, %v786
      $region60: #{tpu_custom_call.1} parent=51 // pred_fallthru
        _
      // Predicated region
      $region61: #{tpu_custom_call.1} parent=51 // pred_check
        %p789 = pneg %p211
      $region62: #{tpu_custom_call.1} parent=51 // pred_check_branch
        %791 = sbr.rel (%p789) target = $region64
      $region63: #{tpu_custom_call.1} parent=51 // pred_region
        _
      $region64: #{tpu_custom_call.1} parent=51 // pred_fallthru
        _
      // Predicated region
      $region65: #{tpu_custom_call.1} parent=51 // pred_check
        %p792 = pneg %p211
      $region66: #{tpu_custom_call.1} parent=51 // pred_check_branch
        %794 = sbr.rel (%p792) target = $region68
      $region67: #{tpu_custom_call.1} parent=51 // pred_region
        _
      $region68: #{tpu_custom_call.1} parent=51 // pred_fallthru
        _
    $region52: #{tpu_custom_call.1} parent=5 // pred_fallthru
      _
    %p795 = scmp.le.s32.totalorder 2, %s15
    // Predicated region
    $region69: #{tpu_custom_call.1} parent=5 // pred_check
      %p796 = pneg %p795
    $region70: #{tpu_custom_call.1} parent=5 // pred_check_branch
      %798 = sbr.rel (%p796) target = $region72
    $region71: #{tpu_custom_call.1} parent=5 // pred_region
      %s799 = ssub.s32 %s15, 2
    $region72: #{tpu_custom_call.1} parent=5 // pred_fallthru
      _
  $region6: #{tpu_custom_call.1} parent=0 // loop_footer
    %s19 = sadd.s32 1, %s15
  $region7: #{tpu_custom_call.1} parent=0 // loop_footer_branch
    %14 = sbr.rel target = $region3
  $region8: #{tpu_custom_call.1} parent=0 // loop_exit
    _

</llo_original>
